<compile_context>
chip_gen: v5e
topology: v5e:2x2
jax: 0.10.0
libtpu: 0.0.40
codegen_flags: <defaults>
</compile_context>

<pallas_src>
import numpy as np
import jax
import jax.numpy as jnp
from jax.experimental import pallas as pl
from jax.experimental.pallas import tpu as pltpu

_I32_MIN = int(np.iinfo(np.int32).min)

_T_TILE_CAP = 2048   # multiple of 32 (int8 output sublane tile)
_E_TILE_CAP = 1024   # multiple of 128 (lane-dense unmasked stores)


def _round_up(x: int, m: int) -> int:
    return ((x + m - 1) // m) * m


def _choose_tiles(T: int, E: int):
    """Pick (T_pad, T_TILE, E_pad, E_TILE) respecting int8 (32,128) tiling and VMEM budget."""
    # env (lane) axis: pad to multiple of 128, tile with largest 128-multiple divisor <= cap
    E_pad = max(128, _round_up(E, 128))
    n_lane_blocks = E_pad // 128
    E_TILE = 128
    for nb in range(min(n_lane_blocks, _E_TILE_CAP // 128), 0, -1):
        if n_lane_blocks % nb == 0:
            E_TILE = nb * 128
            break

    # task (sublane) axis
    T_pad = _round_up(max(T, 1), 32)
    if T_pad <= 32:
        T_TILE = T_pad                                  # tiny problem: 1 grid step
    elif T_pad <= 2 * _T_TILE_CAP:
        T_TILE = _round_up((T_pad + 1) // 2, 32)        # exactly 2 T tiles -> v7x megacore
        T_pad = 2 * T_TILE
    else:
        T_TILE = _T_TILE_CAP
        T_pad = _round_up(T_pad, T_TILE)
    return T_pad, T_TILE, E_pad, E_TILE


def _entry_mask_kernel(sched_ref, ts_ref, mask_ref):
    # sched_ref: [T_TILE, 2]      int32  (cols: start_time, env_id)
    # ts_ref:    [1, E_TILE]      int32  (timestep per env, env on the lane axis)
    # mask_ref:  [T_TILE, E_TILE] int8   (entry mask, task=sublane, env=lane)
    sched = sched_ref[...]
    ts = ts_ref[...]
    e_tile = ts.shape[1]

    start = sched[:, 0:1]                    # [T_TILE, 1]
    envid = sched[:, 1:2]                    # [T_TILE, 1]

    # global env index = E-tile offset + lane index (env_range generated in-kernel)
    j = pl.program_id(0)                     # E-tile index (outer grid axis)
    env_iota = jax.lax.broadcasted_iota(jnp.int32, (1, e_tile), 1) + j * e_tile

    starts_now = start == ts                                 # [T_TILE, E_TILE]
    valid_env = (envid == env_iota) | (envid == -1)          # [T_TILE, E_TILE]
    mask_ref[...] = (starts_now & valid_env).astype(jnp.int8)


def _build_mask_fn(T: int, E: int):
    """Returns (jit'd fn(sched_padded, timesteps) -> (mask[:T,:E] int8, any bool), T_pad)."""
    T_pad, T_TILE, E_pad, E_TILE = _choose_tiles(T, E)
    grid = (E_pad // E_TILE, T_pad // T_TILE)   # E outer (ts block changes on outer axis)

    kernel = pl.pallas_call(
        _entry_mask_kernel,
        out_shape=jax.ShapeDtypeStruct((T_pad, E_pad), jnp.int8),
        grid=grid,
        in_specs=[
            pl.BlockSpec((T_TILE, 2), lambda j, i: (i, 0)),
            pl.BlockSpec((1, E_TILE), lambda j, i: (0, j)),
        ],
        out_specs=pl.BlockSpec((T_TILE, E_TILE), lambda j, i: (i, j)),
        compiler_params=pltpu.CompilerParams(
            dimension_semantics=("parallel", "parallel"),
            vmem_limit_bytes=32 << 20),
    )

    def fn(sched_padded, timesteps):
        # pad timesteps with a non-matching sentinel (single fused op inside this jit)
        ts2 = jnp.pad(timesteps.reshape(1, E), ((0, 0), (0, E_pad - E)),
                      constant_values=_I32_MIN + 1)
        mask = kernel(sched_padded, ts2)
        mask_valid = mask[:T, :E]                 # slice on device: only T*E bytes cross PCIe
        return mask_valid, jnp.any(mask_valid)

    return jax.jit(fn), T_pad


class PassengerEntryTransition:
    """JAX/Pallas mirror of the torch PassengerEntryTransition forward pass."""

    def __init__(self, schedule, parallel_envs: int):
        schedule = np.asarray(schedule, dtype=np.int32)
        assert schedule.ndim == 2 and schedule.shape[1] == 7
        self.schedule_np = schedule                     # host copy for post-compaction gather
        self.T = int(schedule.shape[0])
        self.E = int(parallel_envs)

        T_pad, _, _, _ = _choose_tiles(self.T, self.E)
        # Pad the (static) schedule ONCE with non-matching sentinels; reused every step.
        sched2 = np.full((T_pad, 2), _I32_MIN, dtype=np.int32)
        sched2[:self.T, :] = schedule[:, :2]
        self.sched_padded = jnp.asarray(sched2)

        self._mask_fn, _ = _build_mask_fn(self.T, self.E)

    def entry_mask(self, timesteps):
        """Device-side [T, E] int8 entry mask plus scalar 'any entries' flag."""
        timesteps = jnp.asarray(timesteps, dtype=jnp.int32)
        assert timesteps.shape[0] == self.E, (timesteps.shape, self.E)
        return self._mask_fn(self.sched_padded, timesteps)

    def forward(self, timesteps, passengers=None):
        """Returns the updated passengers array, int32 [P', 11]."""
        timesteps = jnp.asarray(timesteps, dtype=jnp.int32)
        mask_dev, any_dev = self.entry_mask(timesteps)

        # Empty-mask fast path: only a scalar crosses the device->host boundary.
        if not bool(jax.device_get(any_dev)):
            if passengers is None:
                return np.empty((0, 11), dtype=np.int32)
            return np.asarray(passengers, dtype=np.int32)

        # --- host-side glue: data-dependent compaction + stable sort ---
        # TODO(synk): torch.where() yields a dynamic-shape index set; there is no
        # fixed-shape Pallas equivalent, so compaction / concat / stable argsort stay on
        # host — only the small, already-sliced [T, E] int8 mask is transferred.
        mask_np = np.asarray(jax.device_get(mask_dev)).astype(bool)      # [T, E]
        ts_np = np.asarray(jax.device_get(timesteps), dtype=np.int32)    # [E]

        task_idx, env_idx = np.where(mask_np)          # row-major, same as torch.where
        n = task_idx.shape[0]
        new_rows = np.empty((n, 11), dtype=np.int32)
        new_rows[:, 0] = env_idx                                  # env_range[batch_indices]
        new_rows[:, 1:6] = self.schedule_np[task_idx, 2:7]        # x0, y0, x1, y1, fare
        new_rows[:, 6] = 0
        new_rows[:, 7] = -1
        new_rows[:, 8] = ts_np[env_idx]                           # timesteps[task_store[:, 0]]
        new_rows[:, 9] = -1
        new_rows[:, 10] = -1

        if passengers is None:
            out = new_rows
        else:
            out = np.concatenate([np.asarray(passengers, dtype=np.int32), new_rows], axis=0)

        order = np.argsort(out[:, 0], kind="stable")
        return out[order]

    __call__ = forward


def _reference_numpy(schedule, timesteps, parallel_envs, passengers=None):
    """Pure-numpy transcription of the torch forward for verification."""
    schedule = np.asarray(schedule, dtype=np.int32)
    timesteps = np.asarray(timesteps, dtype=np.int32)
    env_range = np.arange(parallel_envs, dtype=np.int32)

    starts_now = schedule[:, 0][:, None] == timesteps[None, :]
    valid_env = (schedule[:, 1][:, None] == env_range[None, :]) | (schedule[:, 1][:, None] == -1)
    entry_mask = starts_now & valid_env
    if not entry_mask.any():
        if passengers is None:
            return np.empty((0, 11), dtype=np.int32)
        return np.asarray(passengers, dtype=np.int32)

    task_indices, batch_indices = np.where(entry_mask)
    entered = schedule[task_indices].copy()
    entered[:, 1] = env_range[batch_indices]
    n = entered.shape[0]
    new_data = np.full((n, 5), -1, dtype=np.int32)
    task_store = np.concatenate([entered[:, 1:], new_data], axis=1).astype(np.int32)
    task_store[:, 6] = 0
    task_store[:, 7] = -1
    task_store[:, 8] = timesteps[task_store[:, 0]]
    task_store[:, 9] = -1
    task_store[:, 10] = -1

    if passengers is None:
        out = task_store
    else:
        out = np.concatenate([np.asarray(passengers, dtype=np.int32), task_store], axis=0)
    return out[np.argsort(out[:, 0], kind="stable")]


if __name__ == "__main__":
    key = jax.random.PRNGKey(0)
    k1, k2, k3, k4 = jax.random.split(key, 4)

    # --- small primary case ---
    T = 8              # number of scheduled tasks
    E = 4              # parallel environments

    start_times = jax.random.randint(k1, (T,), 0, 3, dtype=jnp.int32)   # small range -> matches likely
    env_ids = jax.random.randint(k2, (T,), -1, E, dtype=jnp.int32)      # -1 means "all envs"
    coords = jax.random.randint(k3, (T, 5), 0, 10, dtype=jnp.int32)     # x0, y0, x1, y1, fare
    schedule = np.asarray(jnp.concatenate(
        [start_times[:, None], env_ids[:, None], coords], axis=1)).astype(np.int32)  # [T, 7]
    timesteps = jax.random.randint(k4, (E,), 0, 3, dtype=jnp.int32)     # [E]

    transition = PassengerEntryTransition(schedule, E)

    # Run the Pallas kernel once and block on its output.
    mask_dev, any_dev = transition.entry_mask(timesteps)
    jax.block_until_ready(mask_dev)

    result = transition(timesteps, passengers=None)
    expected = _reference_numpy(schedule, timesteps, E, passengers=None)
    assert result.shape == expected.shape, (result.shape, expected.shape)
    assert result.dtype == np.int32
    np.testing.assert_array_equal(result, expected)

    # Pre-existing passengers get concatenated + stably sorted.
    existing = np.array([[2, 1, 1, 5, 5, 9, 0, -1, 0, -1, -1],
                         [0, 3, 3, 7, 7, 4, 0, -1, 1, -1, -1]], dtype=np.int32)
    result2 = transition(timesteps, passengers=existing)
    expected2 = _reference_numpy(schedule, timesteps, E, passengers=existing)
    np.testing.assert_array_equal(result2, expected2)

    # --- modest ragged case exercising the 2-way T split and lane padding ---
    T2, E2 = 100, 150
    kk = jax.random.split(jax.random.PRNGKey(1), 4)
    sched2 = np.asarray(jnp.concatenate(
        [jax.random.randint(kk[0], (T2, 1), 0, 4, dtype=jnp.int32),
         jax.random.randint(kk[1], (T2, 1), -1, E2, dtype=jnp.int32),
         jax.random.randint(kk[2], (T2, 5), 0, 20, dtype=jnp.int32)], axis=1)).astype(np.int32)
    ts2 = jax.random.randint(kk[3], (E2,), 0, 4, dtype=jnp.int32)
    transition2 = PassengerEntryTransition(sched2, E2)
    res3 = transition2(ts2, passengers=None)
    exp3 = _reference_numpy(sched2, ts2, E2, passengers=None)
    np.testing.assert_array_equal(res3, exp3)

    print("KERNEL_OK")
</pallas_src>

<mosaic_0001>
module attributes {stable_mosaic.version = 11 : i64} {
  func.func @_entry_mask_kernel(%arg0: i32, %arg1: i32, %arg2: memref<32x2xi32, #tpu.memory_space<vmem>>, %arg3: memref<1x128xi32, #tpu.memory_space<vmem>>, %arg4: memref<32x128xi8, #tpu.memory_space<vmem>>) attributes {dimension_semantics = [#tpu.dimension_semantics<parallel>, #tpu.dimension_semantics<parallel>], iteration_bounds = array<i64: 1, 1>, scalar_prefetch = 0 : i64, scratch_operands = 0 : i64, tpu.core_type = #tpu.core_type<tc>, window_params = [{transform_indices = @transform_0, window_bounds = array<i64: 32, 2>}, {transform_indices = @transform_1, window_bounds = array<i64: 1, 128>}, {transform_indices = @transform_2, window_bounds = array<i64: 32, 128>}]} {
    %c0 = arith.constant 0 : index
    %c0_0 = arith.constant 0 : index
    %0 = vector.load %arg2[%c0, %c0_0] : memref<32x2xi32, #tpu.memory_space<vmem>>, vector<32x2xi32>
    %c0_1 = arith.constant 0 : index
    %c0_2 = arith.constant 0 : index
    %1 = vector.load %arg3[%c0_1, %c0_2] : memref<1x128xi32, #tpu.memory_space<vmem>>, vector<1x128xi32>
    %2 = vector.extract_strided_slice %0 {offsets = [0, 0], sizes = [32, 1], strides = [1, 1]} : vector<32x2xi32> to vector<32x1xi32>
    %3 = vector.extract_strided_slice %0 {offsets = [0, 1], sizes = [32, 1], strides = [1, 1]} : vector<32x2xi32> to vector<32x1xi32>
    %4 = tpu.iota {dimensions = array<i32: 1>} : vector<1x128xi32>
    %c128_i32 = arith.constant 128 : i32
    %5 = arith.muli %arg0, %c128_i32 : i32
    %6 = vector.broadcast %5 : i32 to vector<1x128xi32>
    %7 = arith.addi %4, %6 : vector<1x128xi32>
    %8 = vector.broadcast %2 : vector<32x1xi32> to vector<32x128xi32>
    %9 = vector.broadcast %1 : vector<1x128xi32> to vector<32x128xi32>
    %10 = arith.cmpi eq, %8, %9 : vector<32x128xi32>
    %11 = vector.broadcast %3 : vector<32x1xi32> to vector<32x128xi32>
    %12 = vector.broadcast %7 : vector<1x128xi32> to vector<32x128xi32>
    %13 = arith.cmpi eq, %11, %12 : vector<32x128xi32>
    %c-1_i32 = arith.constant -1 : i32
    %14 = vector.broadcast %c-1_i32 : i32 to vector<32x1xi32>
    %15 = arith.cmpi eq, %3, %14 : vector<32x1xi32>
    %16 = vector.broadcast %15 : vector<32x1xi1> to vector<32x128xi1>
    %17 = arith.ori %13, %16 : vector<32x128xi1>
    %18 = arith.andi %10, %17 : vector<32x128xi1>
    %19 = arith.extui %18 : vector<32x128xi1> to vector<32x128xi8>
    %c0_3 = arith.constant 0 : index
    %c0_4 = arith.constant 0 : index
    %20 = vector.load %arg4[%c0_3, %c0_4] : memref<32x128xi8, #tpu.memory_space<vmem>>, vector<32x128xi8>
    tpu.vector_store %arg4[%c0_3, %c0_4], %19 {strides = array<i32>} : memref<32x128xi8, #tpu.memory_space<vmem>>, vector<32x128xi8>,
    return
  }
  func.func @transform_0(%arg0: i32, %arg1: i32) -> (i32, i32) {
    %c0_i32 = arith.constant 0 : i32
    %c0_i32_0 = arith.constant 0 : i32
    return %arg1, %c0_i32 : i32, i32
  }
  func.func @transform_1(%arg0: i32, %arg1: i32) -> (i32, i32) {
    %c0_i32 = arith.constant 0 : i32
    %c0_i32_0 = arith.constant 0 : i32
    return %c0_i32, %arg0 : i32, i32
  }
  func.func @transform_2(%arg0: i32, %arg1: i32) -> (i32, i32) {
    %c0_i32 = arith.constant 0 : i32
    return %arg1, %arg0 : i32, i32
  }
}

</mosaic_0001>

<llo_original>
// kernel: fn.1
$region0: #{fn.1}
  #allocation0 [shape = 'u32[]', space=smem, size = 0x4, offset = 0x4, fixed_abs, tag = 'smem constant byte address 0x4 - core index']
  #allocation1 [shape = 'u32[72,128]{1,0:T(1,128)}', space=vmem, size = 0x9000, scoped, tag = 'internal scratch']
  %s0 = inlined_call_operand.vmem [shape: s32[32,2], index: 0, kind: input, shape index: {}]
  %s1 = inlined_call_operand.vmem [shape: s32[1,128], index: 1, kind: input, shape index: {}]
  %s2 = inlined_call_operand.vmem [shape: s8[32,128], index: 2, kind: output, shape index: {}]
  %s3 = sld [smem:[#allocation0]]
  $region18: #{fn.1} parent=0
    _
  %s5 = ssub.s32 1, %s3
  %s6 = scalar_select 0, %s5, %s3
  // Predicated region
  $region2: #{fn.1} parent=0 // pred_check
    _
  $region3: #{fn.1} parent=0 // pred_check_branch
    %8 = sbr.rel (0) target = $region5
  $region4: #{fn.1} parent=0 // pred_region
    _
  $region5: #{fn.1} parent=0 // pred_fallthru
    _
  // Predicated region
  $region6: #{fn.1} parent=0 // pred_check
    _
  $region7: #{fn.1} parent=0 // pred_check_branch
    %10 = sbr.rel (0) target = $region9
  $region8: #{fn.1} parent=0 // pred_region
    _
  $region9: #{fn.1} parent=0 // pred_fallthru
    _
  %v13 = vld [vmem:[%s0] sm:$0xff]
  %v14 = vld [vmem:[%s0 + $0x8] sm:$0xff]
  %v15 = vld [vmem:[%s0 + $0x10] sm:$0xff]
  %v16 = vld [vmem:[%s0 + $0x18] sm:$0xff]
  %v17 = vld [vmem:[%s1] sm:$0x1]
  %v18 = vlaneseq
  %v19 = vand.u32 %v18, 127
  %s20 = smul.u32 0, 128
  %v21 = vstv %s20
  %v22 = vadd.s32 %v19, %v21
  %23 = vset.pattern.permute.xlu0 0
  %24 = vperm.xlu0 %23, %v13
  %v25 = vpop.permute.xlu0 %24
  %26 = vset.pattern.permute.xlu0 0
  %27 = vperm.xlu0 %26, %v14
  %v28 = vpop.permute.xlu0 %27
  %29 = vset.pattern.permute.xlu0 0
  %30 = vperm.xlu0 %29, %v15
  %v31 = vpop.permute.xlu0 %30
  %32 = vset.pattern.permute.xlu0 0
  %33 = vperm.xlu0 %32, %v16
  %v34 = vpop.permute.xlu0 %33
  %v35 = vperm.slane %v17, 0
  %vm36 = vcmp.eq.s32.totalorder %v25, %v35
  %vm37 = vcmp.eq.s32.totalorder %v28, %v35
  %vm38 = vcmp.eq.s32.totalorder %v31, %v35
  %vm39 = vcmp.eq.s32.totalorder %v34, %v35
  %40 = vset.pattern.permute.xlu0 1
  %41 = vperm.xlu0 %40, %v13
  %v42 = vpop.permute.xlu0 %41
  %43 = vset.pattern.permute.xlu0 1
  %44 = vperm.xlu0 %43, %v14
  %v45 = vpop.permute.xlu0 %44
  %46 = vset.pattern.permute.xlu0 1
  %47 = vperm.xlu0 %46, %v15
  %v48 = vpop.permute.xlu0 %47
  %49 = vset.pattern.permute.xlu0 1
  %50 = vperm.xlu0 %49, %v16
  %v51 = vpop.permute.xlu0 %50
  %vm52 = vcmp.eq.s32.totalorder %v42, %v22
  %vm53 = vcmp.eq.s32.totalorder %v45, %v22
  %vm54 = vcmp.eq.s32.totalorder %v48, %v22
  %vm55 = vcmp.eq.s32.totalorder %v51, %v22
  %vm56 = vcmp.eq.s32.totalorder %v13, 4294967295
  %vm57 = vcmp.eq.s32.totalorder %v14, 4294967295
  %vm58 = vcmp.eq.s32.totalorder %v15, 4294967295
  %vm59 = vcmp.eq.s32.totalorder %v16, 4294967295
  %v60 = vsel %vm56, 1, 0
  %v61 = vsel %vm57, 1, 0
  %v62 = vsel %vm58, 1, 0
  %v63 = vsel %vm59, 1, 0
  %64 = vset.pattern.permute.xlu0 1
  %65 = vperm.xlu0 %64, %v60
  %v66 = vpop.permute.xlu0 %65
  %67 = vset.pattern.permute.xlu0 1
  %68 = vperm.xlu0 %67, %v61
  %v69 = vpop.permute.xlu0 %68
  %70 = vset.pattern.permute.xlu0 1
  %71 = vperm.xlu0 %70, %v62
  %v72 = vpop.permute.xlu0 %71
  %73 = vset.pattern.permute.xlu0 1
  %74 = vperm.xlu0 %73, %v63
  %v75 = vpop.permute.xlu0 %74
  %vm76 = vcmp.eq.s32.totalorder %v66, 1
  %vm77 = vcmp.eq.s32.totalorder %v69, 1
  %vm78 = vcmp.eq.s32.totalorder %v72, 1
  %vm79 = vcmp.eq.s32.totalorder %v75, 1
  %vm80 = vmor %vm52, %vm76
  %vm81 = vmor %vm53, %vm77
  %vm82 = vmor %vm54, %vm78
  %vm83 = vmor %vm55, %vm79
  %vm84 = vmand %vm36, %vm80
  %vm85 = vmand %vm37, %vm81
  %vm86 = vmand %vm38, %vm82
  %vm87 = vmand %vm39, %vm83
  %vm88 = vmpackc.low %vm85, %vm84
  %vm89 = vmpackc.low %vm87, %vm86
  %v90 = vsel %vm88, 16711935, 0
  %v91 = vsel %vm89, 16711935, 0
  %v92 = vpack.c.b8 %v91, %v90
  %vm93 = vnez %v92
  %v94 = vsel %vm93, 16843009, 0
  %v95 = vunpack.c.0.s8 %v94
  %v96 = vunpack.c.1.s8 %v94
  %v97 = vunpack.c.2.s8 %v94
  %v98 = vunpack.c.3.s8 %v94
  %v99 = vpack.c.b16 %v95, %v95
  %v100 = vpack.c.b8 %v99, %v99
  %v101 = vpack.c.b16 %v96, %v96
  %v102 = vpack.c.b8 %v101, %v101
  %v103 = vpack.c.b16 %v97, %v97
  %v104 = vpack.c.b8 %v103, %v103
  %v105 = vpack.c.b16 %v98, %v98
  %v106 = vpack.c.b8 %v105, %v105
  %107 = vst [vmem:[%s2] sm:$0x3] %v100
  %108 = vst [vmem:[%s2 + $0x2] sm:$0x3] %v102
  %109 = vst [vmem:[%s2 + $0x4] sm:$0x3] %v104
  %110 = vst [vmem:[%s2 + $0x6] sm:$0x3] %v106
  // Predicated region
  $region10: #{fn.1} parent=0 // pred_check
    _
  $region11: #{fn.1} parent=0 // pred_check_branch
    %112 = sbr.rel (0) target = $region13
  $region12: #{fn.1} parent=0 // pred_region
    _
  $region13: #{fn.1} parent=0 // pred_fallthru
    _
  // Predicated region
  $region14: #{fn.1} parent=0 // pred_check
    _
  $region15: #{fn.1} parent=0 // pred_check_branch
    %114 = sbr.rel (0) target = $region17
  $region16: #{fn.1} parent=0 // pred_region
    _
  $region17: #{fn.1} parent=0 // pred_fallthru
    _

</llo_original>
